<compile_context>
chip_gen: v7x
topology: tpu7x:2x2x1
jax: 0.10.0
libtpu: 0.0.40
codegen_flags: <defaults>
</compile_context>

<pallas_src>
import functools
from typing import NamedTuple

import jax
import jax.numpy as jnp
from jax import lax
from jax.experimental import pallas as pl
from jax.experimental.pallas import tpu as pltpu

BN_EPS = 1e-5
LANE = 128


def _round_up(n, m=LANE):
    return ((n + m - 1) // m) * m


class Meta(NamedTuple):
    D: int
    Z: int
    DP: int
    ZP: int
    H0: int
    H1: int
    vec_slices: tuple  # ((name, (off, size)), ...)  -- hashable, jit-static


def vae_kernel(xe_ref, wA_ref, wB_ref, vec_ref, out_ref, *, meta):
    D, Z = meta.D, meta.Z
    DP, ZP, H0, H1 = meta.DP, meta.ZP, meta.H0, meta.H1
    slices = dict(meta.vec_slices)

    def vec(name):
        off, size = slices[name]
        return vec_ref[:, off:off + size]          # lane-aligned static slice

    def mm(h, w):
        # bf16 x bf16 MXU matmul with f32 accumulation.
        return jnp.dot(h.astype(jnp.bfloat16), w, preferred_element_type=jnp.float32)

    def bn_relu(h, gamma, beta):
        # Training-mode BatchNorm1d (+ReLU), one-pass stats: var = E[h^2]-mean^2.
        mean = jnp.mean(h, axis=0, keepdims=True)
        mean_sq = jnp.mean(h * h, axis=0, keepdims=True)
        var = mean_sq - mean * mean
        scale = lax.rsqrt(var + BN_EPS) * gamma    # gamma folded into rsqrt result
        return jnp.maximum((h - mean) * scale + beta, 0.0)

    # ---- unpack fused input / stacked weights (full-extent / aligned slices) ----
    x = xe_ref[:, :DP]
    eps = xe_ref[:, DP:DP + ZP]
    w1 = wA_ref[0][:DP, :H0]
    whead = wA_ref[1][:H1, :2 * ZP]
    wd1 = wA_ref[2][:ZP, :H0]
    w2 = wB_ref[0][:H0, :H1]
    wd2 = wB_ref[1][:H0, :H1]
    wd3 = wB_ref[2][:H1, :DP]

    # ---- Encoder (linear biases before training-mode BN are dead -> dropped) ----
    h1 = bn_relu(mm(x, w1), vec("g1"), vec("be1"))
    h2 = bn_relu(mm(h1, w2), vec("g2"), vec("be2"))

    # ---- Fused mu | log_var head (each padded to ZP lanes) ----
    head = mm(h2, whead) + vec("bhead")
    out_ref[:, DP:] = head
    mu = head[:, :ZP]
    log_var = head[:, ZP:]

    # ---- Reparameterize (padded lanes: eps=0, mu=0, log_var=0 -> z=0) ----
    z = eps * jnp.exp(0.5 * log_var) + mu

    # ---- Decoder ----
    d1 = jnp.maximum(mm(z, wd1) + vec("bd1"), 0.0)
    d2 = bn_relu(mm(d1, wd2), vec("gd2"), vec("bed2"))
    out_ref[:, :DP] = jax.nn.sigmoid(mm(d2, wd3) + vec("bd3"))


def prepare_params(params, input_dim, z_dim):
    """One-time (off the hot path) weight packing: lane-pad, fuse the mu/log_var
    head, cast weights to bf16, stack into two operands, pack all 1-D vectors
    into one lane-dense f32 array."""
    (w1, b1, g1, be1,
     w2, b2, g2, be2,
     wmu, bmu, wlv, blv,
     wd1, bd1,
     wd2, bd2, gd2, bed2,
     wd3, bd3) = params
    del b1, b2, bd2  # dead: immediately followed by training-mode BatchNorm

    D, Z = input_dim, z_dim
    H0, H1 = w1.shape[1], w2.shape[1]
    DP, ZP = _round_up(D), _round_up(Z)
    assert H1 <= H0, "wd3 fold into the wB stack requires H1 <= H0"
    f32, bf16 = jnp.float32, jnp.bfloat16

    # Stack A: encoder L1 | fused mu/log_var head | decoder L1.
    RA, CA = max(DP, H1, ZP), max(H0, 2 * ZP)
    wA = (jnp.zeros((3, RA, CA), f32)
          .at[0, :D, :H0].set(w1)
          .at[1, :H1, :Z].set(wmu)
          .at[1, :H1, ZP:ZP + Z].set(wlv)
          .at[2, :Z, :H0].set(wd1)).astype(bf16)

    # Stack B: encoder L2 | decoder L2 | decoder output (zero-padded rows/cols).
    CB = max(H1, DP)
    wB = (jnp.zeros((3, H0, CB), f32)
          .at[0, :H0, :H1].set(w2)
          .at[1, :H0, :H1].set(wd2)
          .at[2, :H1, :D].set(wd3)).astype(bf16)

    # One packed [1, total] f32 vector for the remaining biases/gammas/betas.
    bhead = (jnp.zeros((1, 2 * ZP), f32)
             .at[:, :Z].set(bmu.reshape(1, -1))
             .at[:, ZP:ZP + Z].set(blv.reshape(1, -1)))
    bd3_p = jnp.zeros((1, DP), f32).at[:, :D].set(bd3.reshape(1, -1))
    pieces = [("g1", g1), ("be1", be1), ("g2", g2), ("be2", be2),
              ("bhead", bhead), ("bd1", bd1),
              ("gd2", gd2), ("bed2", bed2), ("bd3", bd3_p)]
    slices, cols, off = {}, [], 0
    for name, v in pieces:
        size = v.shape[-1]
        slices[name] = (off, size)
        cols.append(v.reshape(1, size).astype(f32))
        off += size
    vec = jnp.concatenate(cols, axis=1)

    meta = Meta(D=D, Z=Z, DP=DP, ZP=ZP, H0=H0, H1=H1,
                vec_slices=tuple(slices.items()))
    packed = (wA, wB, vec)
    return jax.device_put(packed), meta


@functools.partial(jax.jit, static_argnames=("meta",))
def vae_forward(x, eps, packed, meta):
    """x: [B, D] f32, eps: [B, Z] f32, packed/meta from prepare_params."""
    wA, wB, vec = packed
    B = x.shape[0]
    D, Z, DP, ZP = meta.D, meta.Z, meta.DP, meta.ZP

    # Per-call activation packing only: one lane-dense [B, DP+ZP] input.
    xe = (jnp.zeros((B, DP + ZP), jnp.float32)
          .at[:, :D].set(x)
          .at[:, DP:DP + Z].set(eps))

    kernel = functools.partial(vae_kernel, meta=meta)
    vmem = pl.BlockSpec(memory_space=pltpu.MemorySpace.VMEM)

    out = pl.pallas_call(
        kernel,
        out_shape=jax.ShapeDtypeStruct((B, DP + 2 * ZP), jnp.float32),
        in_specs=[vmem] * 4,
        out_specs=vmem,
    )(xe, wA, wB, vec)

    recon = out[:, :D]
    mu = out[:, DP:DP + Z]
    log_var = out[:, DP + ZP:DP + ZP + Z]
    return recon, mu, log_var


def init_linear(key, fan_in, fan_out):
    """PyTorch-style nn.Linear init: U(-1/sqrt(fan_in), 1/sqrt(fan_in))."""
    kw, kb = jax.random.split(key)
    bound = 1.0 / jnp.sqrt(float(fan_in))
    w = jax.random.uniform(kw, (fan_in, fan_out), jnp.float32, -bound, bound)
    b = jax.random.uniform(kb, (1, fan_out), jnp.float32, -bound, bound)
    return w, b


def make_params(key, input_dim, hidden_dims, z_dim):
    h0, h1 = hidden_dims  # [256, 128] by default
    keys = jax.random.split(key, 8)

    w1, b1 = init_linear(keys[0], input_dim, h0)
    g1 = jnp.ones((1, h0), jnp.float32)
    be1 = jnp.zeros((1, h0), jnp.float32)

    w2, b2 = init_linear(keys[1], h0, h1)
    g2 = jnp.ones((1, h1), jnp.float32)
    be2 = jnp.zeros((1, h1), jnp.float32)

    wmu, bmu = init_linear(keys[2], h1, z_dim)
    wlv, blv = init_linear(keys[3], h1, z_dim)

    # Decoder: Linear(z,256)+ReLU -> Linear(256,128)+BN+ReLU -> Linear(128,D)+Sigmoid
    wd1, bd1 = init_linear(keys[4], z_dim, h0)
    wd2, bd2 = init_linear(keys[5], h0, h1)
    gd2 = jnp.ones((1, h1), jnp.float32)
    bed2 = jnp.zeros((1, h1), jnp.float32)
    wd3, bd3 = init_linear(keys[6], h1, input_dim)

    return (
        w1, b1, g1, be1,
        w2, b2, g2, be2,
        wmu, bmu, wlv, blv,
        wd1, bd1,
        wd2, bd2, gd2, bed2,
        wd3, bd3,
    )


def vae_reference(x, eps, params):
    """Pure-JAX reference, mirroring the PyTorch module (including the biases
    before BN).  Weights are bf16-quantized (and dequantized) so the reference
    shares the kernel's weight storage; everything else is f32."""
    def q(w):
        return w.astype(jnp.bfloat16).astype(jnp.float32)

    (w1, b1, g1, be1,
     w2, b2, g2, be2,
     wmu, bmu, wlv, blv,
     wd1, bd1,
     wd2, bd2, gd2, bed2,
     wd3, bd3) = params

    def bn(h, g, b):
        m = jnp.mean(h, axis=0, keepdims=True)
        v = jnp.mean((h - m) ** 2, axis=0, keepdims=True)
        return (h - m) / jnp.sqrt(v + BN_EPS) * g + b

    h1 = jnp.maximum(bn(x @ q(w1) + b1, g1, be1), 0.0)
    h2 = jnp.maximum(bn(h1 @ q(w2) + b2, g2, be2), 0.0)
    mu = h2 @ q(wmu) + bmu
    log_var = h2 @ q(wlv) + blv
    z = eps * jnp.exp(0.5 * log_var) + mu
    d1 = jnp.maximum(z @ q(wd1) + bd1, 0.0)
    d2 = jnp.maximum(bn(d1 @ q(wd2) + bd2, gd2, bed2), 0.0)
    recon = jax.nn.sigmoid(d2 @ q(wd3) + bd3)
    return recon, mu, log_var


if __name__ == "__main__":
    # VAE-consistent shapes: x is [batch, input_dim] feature vectors.
    B = 16            # >= 16 so bf16 LHS sublane packing isn't half zeros
    INPUT_DIM = 64
    HIDDEN_DIMS = [256, 128]
    Z_DIM = 50

    key = jax.random.PRNGKey(0)
    k_x, k_eps, k_p = jax.random.split(key, 3)

    x = jax.random.normal(k_x, (B, INPUT_DIM), jnp.float32)
    eps = jax.random.normal(k_eps, (B, Z_DIM), jnp.float32)
    params = make_params(k_p, INPUT_DIM, HIDDEN_DIMS, Z_DIM)

    # One-time packing, off the per-call hot path.
    packed, meta = prepare_params(params, INPUT_DIM, Z_DIM)

    recon, mu, log_var = vae_forward(x, eps, packed, meta=meta)
    jax.block_until_ready((recon, mu, log_var))

    # Sanity check against a pure-JAX reference (bf16-weight tolerance).
    r_ref, mu_ref, lv_ref = vae_reference(x, eps, params)
    assert recon.shape == (B, INPUT_DIM)
    assert mu.shape == (B, Z_DIM) and log_var.shape == (B, Z_DIM)
    assert jnp.allclose(recon, r_ref, atol=3e-2, rtol=3e-2)
    assert jnp.allclose(mu, mu_ref, atol=3e-2, rtol=3e-2)
    assert jnp.allclose(log_var, lv_ref, atol=3e-2, rtol=3e-2)

    print("KERNEL_OK")
</pallas_src>

<mosaic_0001>
module attributes {stable_mosaic.version = 11 : i64} {
  func.func @vae_kernel(%arg0: memref<16x256xf32, #tpu.memory_space<vmem>>, %arg1: memref<3x128x256xbf16, #tpu.memory_space<vmem>>, %arg2: memref<3x256x128xbf16, #tpu.memory_space<vmem>>, %arg3: memref<1x1664xf32, #tpu.memory_space<vmem>>, %arg4: memref<16x384xf32, #tpu.memory_space<vmem>>) attributes {dimension_semantics = [], scalar_prefetch = 0 : i64, scratch_operands = 0 : i64, tpu.core_type = #tpu.core_type<tc>} {
    %c0 = arith.constant 0 : index
    %c0_0 = arith.constant 0 : index
    %0 = vector.load %arg0[%c0, %c0_0] : memref<16x256xf32, #tpu.memory_space<vmem>>, vector<16x128xf32>
    %c0_1 = arith.constant 0 : index
    %c128 = arith.constant 128 : index
    %1 = vector.load %arg0[%c0_1, %c128] : memref<16x256xf32, #tpu.memory_space<vmem>>, vector<16x128xf32>
    %c0_2 = arith.constant 0 : index
    %c0_3 = arith.constant 0 : index
    %c0_4 = arith.constant 0 : index
    %2 = vector.load %arg1[%c0_2, %c0_3, %c0_4] : memref<3x128x256xbf16, #tpu.memory_space<vmem>>, vector<1x128x256xbf16>
    %3 = vector.shape_cast %2 : vector<1x128x256xbf16> to vector<128x256xbf16>
    %c1 = arith.constant 1 : index
    %c0_5 = arith.constant 0 : index
    %c0_6 = arith.constant 0 : index
    %4 = vector.load %arg1[%c1, %c0_5, %c0_6] : memref<3x128x256xbf16, #tpu.memory_space<vmem>>, vector<1x128x256xbf16>
    %5 = vector.shape_cast %4 : vector<1x128x256xbf16> to vector<128x256xbf16>
    %c2 = arith.constant 2 : index
    %c0_7 = arith.constant 0 : index
    %c0_8 = arith.constant 0 : index
    %6 = vector.load %arg1[%c2, %c0_7, %c0_8] : memref<3x128x256xbf16, #tpu.memory_space<vmem>>, vector<1x128x256xbf16>
    %7 = vector.shape_cast %6 : vector<1x128x256xbf16> to vector<128x256xbf16>
    %c0_9 = arith.constant 0 : index
    %c0_10 = arith.constant 0 : index
    %c0_11 = arith.constant 0 : index
    %8 = vector.load %arg2[%c0_9, %c0_10, %c0_11] : memref<3x256x128xbf16, #tpu.memory_space<vmem>>, vector<1x256x128xbf16>
    %9 = vector.shape_cast %8 : vector<1x256x128xbf16> to vector<256x128xbf16>
    %c1_12 = arith.constant 1 : index
    %c0_13 = arith.constant 0 : index
    %c0_14 = arith.constant 0 : index
    %10 = vector.load %arg2[%c1_12, %c0_13, %c0_14] : memref<3x256x128xbf16, #tpu.memory_space<vmem>>, vector<1x256x128xbf16>
    %11 = vector.shape_cast %10 : vector<1x256x128xbf16> to vector<256x128xbf16>
    %c2_15 = arith.constant 2 : index
    %c0_16 = arith.constant 0 : index
    %c0_17 = arith.constant 0 : index
    %12 = vector.load %arg2[%c2_15, %c0_16, %c0_17] : memref<3x256x128xbf16, #tpu.memory_space<vmem>>, vector<1x256x128xbf16>
    %13 = vector.shape_cast %12 : vector<1x256x128xbf16> to vector<256x128xbf16>
    %14 = vector.extract_strided_slice %13 {offsets = [0, 0], sizes = [128, 128], strides = [1, 1]} : vector<256x128xbf16> to vector<128x128xbf16>
    %15 = arith.truncf %0 : vector<16x128xf32> to vector<16x128xbf16>
    %cst = arith.constant dense<0.000000e+00> : vector<16x256xf32>
    %16 = tpu.matmul %15, %3, %cst {dimension_numbers = #tpu.dot_dimension_numbers<[1], [0], [0], [1], [0, 0, 1, 1], [], []>} : vector<16x128xbf16>, vector<128x256xbf16>, vector<16x256xf32> -> vector<16x256xf32>
    %c0_18 = arith.constant 0 : index
    %c0_19 = arith.constant 0 : index
    %17 = vector.load %arg3[%c0_18, %c0_19] : memref<1x1664xf32, #tpu.memory_space<vmem>>, vector<1x256xf32>
    %c0_20 = arith.constant 0 : index
    %c256 = arith.constant 256 : index
    %18 = vector.load %arg3[%c0_20, %c256] : memref<1x1664xf32, #tpu.memory_space<vmem>>, vector<1x256xf32>
    %cst_21 = arith.constant dense<0.000000e+00> : vector<256xf32>
    %19 = vector.multi_reduction <add>, %16, %cst_21 [0] : vector<16x256xf32> to vector<256xf32>
    %20 = vector.shape_cast %19 : vector<256xf32> to vector<1x256xf32>
    %cst_22 = arith.constant 1.600000e+01 : f32
    %21 = vector.broadcast %cst_22 : f32 to vector<1x256xf32>
    %22 = arith.divf %20, %21 : vector<1x256xf32>
    %23 = arith.mulf %16, %16 : vector<16x256xf32>
    %cst_23 = arith.constant dense<0.000000e+00> : vector<256xf32>
    %24 = vector.multi_reduction <add>, %23, %cst_23 [0] : vector<16x256xf32> to vector<256xf32>
    %25 = vector.shape_cast %24 : vector<256xf32> to vector<1x256xf32>
    %cst_24 = arith.constant 1.600000e+01 : f32
    %26 = vector.broadcast %cst_24 : f32 to vector<1x256xf32>
    %27 = arith.divf %25, %26 : vector<1x256xf32>
    %28 = arith.mulf %22, %22 : vector<1x256xf32>
    %29 = arith.subf %27, %28 : vector<1x256xf32>
    %cst_25 = arith.constant 9.99999974E-6 : f32
    %30 = vector.broadcast %cst_25 : f32 to vector<1x256xf32>
    %31 = arith.addf %29, %30 : vector<1x256xf32>
    %32 = math.rsqrt %31 : vector<1x256xf32>
    %33 = arith.mulf %32, %17 : vector<1x256xf32>
    %34 = vector.broadcast %22 : vector<1x256xf32> to vector<16x256xf32>
    %35 = arith.subf %16, %34 : vector<16x256xf32>
    %36 = vector.broadcast %33 : vector<1x256xf32> to vector<16x256xf32>
    %37 = arith.mulf %35, %36 : vector<16x256xf32>
    %38 = vector.broadcast %18 : vector<1x256xf32> to vector<16x256xf32>
    %39 = arith.addf %37, %38 : vector<16x256xf32>
    %cst_26 = arith.constant 0.000000e+00 : f32
    %40 = vector.broadcast %cst_26 : f32 to vector<16x256xf32>
    %41 = arith.maximumf %39, %40 : vector<16x256xf32>
    %42 = arith.truncf %41 : vector<16x256xf32> to vector<16x256xbf16>
    %cst_27 = arith.constant dense<0.000000e+00> : vector<16x128xf32>
    %43 = tpu.matmul %42, %9, %cst_27 {dimension_numbers = #tpu.dot_dimension_numbers<[1], [0], [0], [1], [0, 0, 1, 1], [], []>} : vector<16x256xbf16>, vector<256x128xbf16>, vector<16x128xf32> -> vector<16x128xf32>
    %c0_28 = arith.constant 0 : index
    %c512 = arith.constant 512 : index
    %44 = vector.load %arg3[%c0_28, %c512] : memref<1x1664xf32, #tpu.memory_space<vmem>>, vector<1x128xf32>
    %c0_29 = arith.constant 0 : index
    %c640 = arith.constant 640 : index
    %45 = vector.load %arg3[%c0_29, %c640] : memref<1x1664xf32, #tpu.memory_space<vmem>>, vector<1x128xf32>
    %cst_30 = arith.constant dense<0.000000e+00> : vector<128xf32>
    %46 = vector.multi_reduction <add>, %43, %cst_30 [0] : vector<16x128xf32> to vector<128xf32>
    %47 = vector.shape_cast %46 : vector<128xf32> to vector<1x128xf32>
    %cst_31 = arith.constant 1.600000e+01 : f32
    %48 = vector.broadcast %cst_31 : f32 to vector<1x128xf32>
    %49 = arith.divf %47, %48 : vector<1x128xf32>
    %50 = arith.mulf %43, %43 : vector<16x128xf32>
    %cst_32 = arith.constant dense<0.000000e+00> : vector<128xf32>
    %51 = vector.multi_reduction <add>, %50, %cst_32 [0] : vector<16x128xf32> to vector<128xf32>
    %52 = vector.shape_cast %51 : vector<128xf32> to vector<1x128xf32>
    %cst_33 = arith.constant 1.600000e+01 : f32
    %53 = vector.broadcast %cst_33 : f32 to vector<1x128xf32>
    %54 = arith.divf %52, %53 : vector<1x128xf32>
    %55 = arith.mulf %49, %49 : vector<1x128xf32>
    %56 = arith.subf %54, %55 : vector<1x128xf32>
    %cst_34 = arith.constant 9.99999974E-6 : f32
    %57 = vector.broadcast %cst_34 : f32 to vector<1x128xf32>
    %58 = arith.addf %56, %57 : vector<1x128xf32>
    %59 = math.rsqrt %58 : vector<1x128xf32>
    %60 = arith.mulf %59, %44 : vector<1x128xf32>
    %61 = vector.broadcast %49 : vector<1x128xf32> to vector<16x128xf32>
    %62 = arith.subf %43, %61 : vector<16x128xf32>
    %63 = vector.broadcast %60 : vector<1x128xf32> to vector<16x128xf32>
    %64 = arith.mulf %62, %63 : vector<16x128xf32>
    %65 = vector.broadcast %45 : vector<1x128xf32> to vector<16x128xf32>
    %66 = arith.addf %64, %65 : vector<16x128xf32>
    %cst_35 = arith.constant 0.000000e+00 : f32
    %67 = vector.broadcast %cst_35 : f32 to vector<16x128xf32>
    %68 = arith.maximumf %66, %67 : vector<16x128xf32>
    %69 = arith.truncf %68 : vector<16x128xf32> to vector<16x128xbf16>
    %cst_36 = arith.constant dense<0.000000e+00> : vector<16x256xf32>
    %70 = tpu.matmul %69, %5, %cst_36 {dimension_numbers = #tpu.dot_dimension_numbers<[1], [0], [0], [1], [0, 0, 1, 1], [], []>} : vector<16x128xbf16>, vector<128x256xbf16>, vector<16x256xf32> -> vector<16x256xf32>
    %c0_37 = arith.constant 0 : index
    %c768 = arith.constant 768 : index
    %71 = vector.load %arg3[%c0_37, %c768] : memref<1x1664xf32, #tpu.memory_space<vmem>>, vector<1x256xf32>
    %72 = vector.broadcast %71 : vector<1x256xf32> to vector<16x256xf32>
    %73 = arith.addf %70, %72 : vector<16x256xf32>
    %c0_38 = arith.constant 0 : index
    %c128_39 = arith.constant 128 : index
    %74 = vector.load %arg4[%c0_38, %c128_39] : memref<16x384xf32, #tpu.memory_space<vmem>>, vector<16x256xf32>
    tpu.vector_store %arg4[%c0_38, %c128_39], %73 {strides = array<i32>} : memref<16x384xf32, #tpu.memory_space<vmem>>, vector<16x256xf32>,
    %75 = vector.extract_strided_slice %73 {offsets = [0, 0], sizes = [16, 128], strides = [1, 1]} : vector<16x256xf32> to vector<16x128xf32>
    %76 = vector.extract_strided_slice %73 {offsets = [0, 128], sizes = [16, 128], strides = [1, 1]} : vector<16x256xf32> to vector<16x128xf32>
    %cst_40 = arith.constant 5.000000e-01 : f32
    %77 = vector.broadcast %cst_40 : f32 to vector<16x128xf32>
    %78 = arith.mulf %77, %76 : vector<16x128xf32>
    %79 = math.exp %78 : vector<16x128xf32>
    %80 = arith.mulf %1, %79 : vector<16x128xf32>
    %81 = arith.addf %80, %75 : vector<16x128xf32>
    %82 = arith.truncf %81 : vector<16x128xf32> to vector<16x128xbf16>
    %cst_41 = arith.constant dense<0.000000e+00> : vector<16x256xf32>
    %83 = tpu.matmul %82, %7, %cst_41 {dimension_numbers = #tpu.dot_dimension_numbers<[1], [0], [0], [1], [0, 0, 1, 1], [], []>} : vector<16x128xbf16>, vector<128x256xbf16>, vector<16x256xf32> -> vector<16x256xf32>
    %c0_42 = arith.constant 0 : index
    %c1024 = arith.constant 1024 : index
    %84 = vector.load %arg3[%c0_42, %c1024] : memref<1x1664xf32, #tpu.memory_space<vmem>>, vector<1x256xf32>
    %85 = vector.broadcast %84 : vector<1x256xf32> to vector<16x256xf32>
    %86 = arith.addf %83, %85 : vector<16x256xf32>
    %cst_43 = arith.constant 0.000000e+00 : f32
    %87 = vector.broadcast %cst_43 : f32 to vector<16x256xf32>
    %88 = arith.maximumf %86, %87 : vector<16x256xf32>
    %89 = arith.truncf %88 : vector<16x256xf32> to vector<16x256xbf16>
    %cst_44 = arith.constant dense<0.000000e+00> : vector<16x128xf32>
    %90 = tpu.matmul %89, %11, %cst_44 {dimension_numbers = #tpu.dot_dimension_numbers<[1], [0], [0], [1], [0, 0, 1, 1], [], []>} : vector<16x256xbf16>, vector<256x128xbf16>, vector<16x128xf32> -> vector<16x128xf32>
    %c0_45 = arith.constant 0 : index
    %c1280 = arith.constant 1280 : index
    %91 = vector.load %arg3[%c0_45, %c1280] : memref<1x1664xf32, #tpu.memory_space<vmem>>, vector<1x128xf32>
    %c0_46 = arith.constant 0 : index
    %c1408 = arith.constant 1408 : index
    %92 = vector.load %arg3[%c0_46, %c1408] : memref<1x1664xf32, #tpu.memory_space<vmem>>, vector<1x128xf32>
    %cst_47 = arith.constant dense<0.000000e+00> : vector<128xf32>
    %93 = vector.multi_reduction <add>, %90, %cst_47 [0] : vector<16x128xf32> to vector<128xf32>
    %94 = vector.shape_cast %93 : vector<128xf32> to vector<1x128xf32>
    %cst_48 = arith.constant 1.600000e+01 : f32
    %95 = vector.broadcast %cst_48 : f32 to vector<1x128xf32>
    %96 = arith.divf %94, %95 : vector<1x128xf32>
    %97 = arith.mulf %90, %90 : vector<16x128xf32>
    %cst_49 = arith.constant dense<0.000000e+00> : vector<128xf32>
    %98 = vector.multi_reduction <add>, %97, %cst_49 [0] : vector<16x128xf32> to vector<128xf32>
    %99 = vector.shape_cast %98 : vector<128xf32> to vector<1x128xf32>
    %cst_50 = arith.constant 1.600000e+01 : f32
    %100 = vector.broadcast %cst_50 : f32 to vector<1x128xf32>
    %101 = arith.divf %99, %100 : vector<1x128xf32>
    %102 = arith.mulf %96, %96 : vector<1x128xf32>
    %103 = arith.subf %101, %102 : vector<1x128xf32>
    %cst_51 = arith.constant 9.99999974E-6 : f32
    %104 = vector.broadcast %cst_51 : f32 to vector<1x128xf32>
    %105 = arith.addf %103, %104 : vector<1x128xf32>
    %106 = math.rsqrt %105 : vector<1x128xf32>
    %107 = arith.mulf %106, %91 : vector<1x128xf32>
    %108 = vector.broadcast %96 : vector<1x128xf32> to vector<16x128xf32>
    %109 = arith.subf %90, %108 : vector<16x128xf32>
    %110 = vector.broadcast %107 : vector<1x128xf32> to vector<16x128xf32>
    %111 = arith.mulf %109, %110 : vector<16x128xf32>
    %112 = vector.broadcast %92 : vector<1x128xf32> to vector<16x128xf32>
    %113 = arith.addf %111, %112 : vector<16x128xf32>
    %cst_52 = arith.constant 0.000000e+00 : f32
    %114 = vector.broadcast %cst_52 : f32 to vector<16x128xf32>
    %115 = arith.maximumf %113, %114 : vector<16x128xf32>
    %116 = arith.truncf %115 : vector<16x128xf32> to vector<16x128xbf16>
    %cst_53 = arith.constant dense<0.000000e+00> : vector<16x128xf32>
    %117 = tpu.matmul %116, %14, %cst_53 {dimension_numbers = #tpu.dot_dimension_numbers<[1], [0], [0], [1], [0, 0, 1, 1], [], []>} : vector<16x128xbf16>, vector<128x128xbf16>, vector<16x128xf32> -> vector<16x128xf32>
    %c0_54 = arith.constant 0 : index
    %c1536 = arith.constant 1536 : index
    %118 = vector.load %arg3[%c0_54, %c1536] : memref<1x1664xf32, #tpu.memory_space<vmem>>, vector<1x128xf32>
    %119 = vector.broadcast %118 : vector<1x128xf32> to vector<16x128xf32>
    %120 = arith.addf %117, %119 : vector<16x128xf32>
    %121 = arith.negf %120 : vector<16x128xf32>
    %122 = math.exp %121 : vector<16x128xf32>
    %cst_55 = arith.constant 1.000000e+00 : f32
    %123 = vector.broadcast %cst_55 : f32 to vector<16x128xf32>
    %124 = arith.addf %123, %122 : vector<16x128xf32>
    %125 = arith.divf %123, %124 : vector<16x128xf32>
    %c0_56 = arith.constant 0 : index
    %c0_57 = arith.constant 0 : index
    %126 = vector.load %arg4[%c0_56, %c0_57] : memref<16x384xf32, #tpu.memory_space<vmem>>, vector<16x128xf32>
    tpu.vector_store %arg4[%c0_56, %c0_57], %125 {strides = array<i32>} : memref<16x384xf32, #tpu.memory_space<vmem>>, vector<16x128xf32>,
    return
  }
}

</mosaic_0001>

<llo_original>
// kernel: vae_forward.1
$region0: #{vae_forward.1}
  #allocation0 [shape = 'u32[]', space=smem, size = 0x4, offset = 0x4, fixed_abs, tag = 'smem constant byte address 0x4 - core index']
  #allocation1 [shape = 'u32[144,128]{1,0:T(1,128)}', space=vmem, size = 0x12000, scoped, tag = 'internal scratch']
  %s0 = inlined_call_operand.vmem [shape: f32[16,256], index: 0, kind: input, shape index: {}]
  %s1 = inlined_call_operand.hbm [shape: bf16[3,128,256], index: 1, kind: input, shape index: {}]
  %s2 = inlined_call_operand.hbm [shape: bf16[3,256,128], index: 2, kind: input, shape index: {}]
  %s3 = inlined_call_operand.vmem [shape: f32[1,1664], index: 3, kind: input, shape index: {}]
  %s4 = inlined_call_operand.vmem [shape: f32[16,384], index: 4, kind: output, shape index: {}]
  %s5 = sld [smem:[#allocation0]]
  $region34: #{vae_forward.1} parent=0
    _
  %s7 = ssub.s32 1, %s5
  %s8 = scalar_select 0, %s7, %s5
  $region1: #{vae_forward.1} parent=0
    #allocation2 [shape = 'u8[196608]{0}', space=vmem, size = 0x30000, scoped, tag = 'input window, operand 1, single buffered']
    #allocation3 [shape = 's32[1]{0}', space=sflag, size = 0x4, scoped, tag = 'scoped memory for vae_forward.1']
    #allocation4 [shape = 'u8[196608]{0}', space=vmem, size = 0x30000, scoped, tag = 'input window, operand 2, single buffered']
    #allocation5 [shape = 's32[1]{0}', space=sflag, size = 0x4, scoped, tag = 'scoped memory for vae_forward.1']
    %9 = vsyncpa [#allocation3], 0
    %10 = vsyncpa [#allocation5], 0
    // Predicated region
    $region2: #{vae_forward.1} parent=1 // pred_check
      _
    $region3: #{vae_forward.1} parent=1 // pred_check_branch
      %12 = sbr.rel (0) target = $region5
    $region4: #{vae_forward.1} parent=1 // pred_region
      _
    $region5: #{vae_forward.1} parent=1 // pred_fallthru
      _
    // Predicated region
    $region6: #{vae_forward.1} parent=1 // pred_check
      _
    $region7: #{vae_forward.1} parent=1 // pred_check_branch
      %14 = sbr.rel (0) target = $region9
    $region8: #{vae_forward.1} parent=1 // pred_region
      %s16 = ssub.s32 6144, 6144
      %17 = vsyncadd [#allocation3], %s16
      %s18 = sshll.u32 [#allocation2], 4
      %s19 = int_to_ptr.vmem [resolvable:$true] %s18
      %24 = dma.hbm_to_vmem [thread:$0]  %s1, 6144, %s19, [#allocation3], 128, 128, 8
    $region9: #{vae_forward.1} parent=1 // pred_fallthru
      _
    // Predicated region
    $region10: #{vae_forward.1} parent=1 // pred_check
      _
    $region11: #{vae_forward.1} parent=1 // pred_check_branch
      %26 = sbr.rel (0) target = $region13
    $region12: #{vae_forward.1} parent=1 // pred_region
      %s28 = ssub.s32 6144, 6144
      %29 = vsyncadd [#allocation5], %s28
      %s30 = sshll.u32 [#allocation4], 4
      %s31 = int_to_ptr.vmem [resolvable:$true] %s30
      %36 = dma.hbm_to_vmem [thread:$0]  %s2, 6144, %s31, [#allocation5], 64, 64, 4
    $region13: #{vae_forward.1} parent=1 // pred_fallthru
      _
    // Predicated region
    $region14: #{vae_forward.1} parent=1 // pred_check
      _
    $region15: #{vae_forward.1} parent=1 // pred_check_branch
      %38 = sbr.rel (0) target = $region17
    $region16: #{vae_forward.1} parent=1 // pred_region
      _
    $region17: #{vae_forward.1} parent=1 // pred_fallthru
      _
    // Predicated region
    $region18: #{vae_forward.1} parent=1 // pred_check
      _
    $region19: #{vae_forward.1} parent=1 // pred_check_branch
      %40 = sbr.rel (0) target = $region21
    $region20: #{vae_forward.1} parent=1 // pred_region
      %41 = dma.done [#allocation3], 6144
    $region21: #{vae_forward.1} parent=1 // pred_fallthru
      _
    // Predicated region
    $region22: #{vae_forward.1} parent=1 // pred_check
      _
    $region23: #{vae_forward.1} parent=1 // pred_check_branch
      %43 = sbr.rel (0) target = $region25
    $region24: #{vae_forward.1} parent=1 // pred_region
      %44 = dma.done [#allocation5], 6144
    $region25: #{vae_forward.1} parent=1 // pred_fallthru
      _
    %v46 = vld [vmem:[%s0] sm:$0xff]
    %v47 = vld [vmem:[%s0 + $0x10] sm:$0xff]
    %v48 = vld [vmem:[%s0 + $0x8] sm:$0xff]
    %v49 = vld [vmem:[%s0 + $0x18] sm:$0xff]
    %v50 = vld [vmem:[#allocation2] sm:$0xff]
    %v51 = vld [vmem:[#allocation2 + $0x8] sm:$0xff]
    %v52 = vld [vmem:[#allocation2 + $0x10] sm:$0xff]
    %v53 = vld [vmem:[#allocation2 + $0x18] sm:$0xff]
    %v54 = vld [vmem:[#allocation2 + $0x20] sm:$0xff]
    %v55 = vld [vmem:[#allocation2 + $0x28] sm:$0xff]
    %v56 = vld [vmem:[#allocation2 + $0x30] sm:$0xff]
    %v57 = vld [vmem:[#allocation2 + $0x38] sm:$0xff]
    %v58 = vld [vmem:[#allocation2 + $0x40] sm:$0xff]
    %v59 = vld [vmem:[#allocation2 + $0x48] sm:$0xff]
    %v60 = vld [vmem:[#allocation2 + $0x50] sm:$0xff]
    %v61 = vld [vmem:[#allocation2 + $0x58] sm:$0xff]
    %v62 = vld [vmem:[#allocation2 + $0x60] sm:$0xff]
    %v63 = vld [vmem:[#allocation2 + $0x68] sm:$0xff]
    %v64 = vld [vmem:[#allocation2 + $0x70] sm:$0xff]
    %v65 = vld [vmem:[#allocation2 + $0x78] sm:$0xff]
    %s66 = scalar_lea.vmem [#allocation2], 128
    %v67 = vld [vmem:[%s66] sm:$0xff]
    %v68 = vld [vmem:[%s66 + $0x8] sm:$0xff]
    %v69 = vld [vmem:[%s66 + $0x10] sm:$0xff]
    %v70 = vld [vmem:[%s66 + $0x18] sm:$0xff]
    %v71 = vld [vmem:[%s66 + $0x20] sm:$0xff]
    %v72 = vld [vmem:[%s66 + $0x28] sm:$0xff]
    %v73 = vld [vmem:[%s66 + $0x30] sm:$0xff]
    %v74 = vld [vmem:[%s66 + $0x38] sm:$0xff]
    %v75 = vld [vmem:[%s66 + $0x40] sm:$0xff]
    %v76 = vld [vmem:[%s66 + $0x48] sm:$0xff]
    %v77 = vld [vmem:[%s66 + $0x50] sm:$0xff]
    %v78 = vld [vmem:[%s66 + $0x58] sm:$0xff]
    %v79 = vld [vmem:[%s66 + $0x60] sm:$0xff]
    %v80 = vld [vmem:[%s66 + $0x68] sm:$0xff]
    %v81 = vld [vmem:[%s66 + $0x70] sm:$0xff]
    %v82 = vld [vmem:[%s66 + $0x78] sm:$0xff]
    %s83 = scalar_lea.vmem [#allocation2], 256
    %v84 = vld [vmem:[%s83] sm:$0xff]
    %v85 = vld [vmem:[%s83 + $0x8] sm:$0xff]
    %v86 = vld [vmem:[%s83 + $0x10] sm:$0xff]
    %v87 = vld [vmem:[%s83 + $0x18] sm:$0xff]
    %v88 = vld [vmem:[%s83 + $0x20] sm:$0xff]
    %v89 = vld [vmem:[%s83 + $0x28] sm:$0xff]
    %v90 = vld [vmem:[%s83 + $0x30] sm:$0xff]
    %v91 = vld [vmem:[%s83 + $0x38] sm:$0xff]
    %v92 = vld [vmem:[%s83 + $0x40] sm:$0xff]
    %v93 = vld [vmem:[%s83 + $0x48] sm:$0xff]
    %v94 = vld [vmem:[%s83 + $0x50] sm:$0xff]
    %v95 = vld [vmem:[%s83 + $0x58] sm:$0xff]
    %v96 = vld [vmem:[%s83 + $0x60] sm:$0xff]
    %v97 = vld [vmem:[%s83 + $0x68] sm:$0xff]
    %v98 = vld [vmem:[%s83 + $0x70] sm:$0xff]
    %v99 = vld [vmem:[%s83 + $0x78] sm:$0xff]
    %v100 = vld [vmem:[#allocation4] sm:$0xf]
    %v101 = vld [vmem:[#allocation4 + $0x4] sm:$0xf]
    %v102 = vld [vmem:[#allocation4 + $0x8] sm:$0xf]
    %v103 = vld [vmem:[#allocation4 + $0xc] sm:$0xf]
    %v104 = vld [vmem:[#allocation4 + $0x10] sm:$0xf]
    %v105 = vld [vmem:[#allocation4 + $0x14] sm:$0xf]
    %v106 = vld [vmem:[#allocation4 + $0x18] sm:$0xf]
    %v107 = vld [vmem:[#allocation4 + $0x1c] sm:$0xf]
    %v108 = vld [vmem:[#allocation4 + $0x20] sm:$0xf]
    %v109 = vld [vmem:[#allocation4 + $0x24] sm:$0xf]
    %v110 = vld [vmem:[#allocation4 + $0x28] sm:$0xf]
    %v111 = vld [vmem:[#allocation4 + $0x2c] sm:$0xf]
    %v112 = vld [vmem:[#allocation4 + $0x30] sm:$0xf]
    %v113 = vld [vmem:[#allocation4 + $0x34] sm:$0xf]
    %v114 = vld [vmem:[#allocation4 + $0x38] sm:$0xf]
    %v115 = vld [vmem:[#allocation4 + $0x3c] sm:$0xf]
    %v116 = vld [vmem:[#allocation4 + $0x40] sm:$0xf]
    %v117 = vld [vmem:[#allocation4 + $0x44] sm:$0xf]
    %v118 = vld [vmem:[#allocation4 + $0x48] sm:$0xf]
    %v119 = vld [vmem:[#allocation4 + $0x4c] sm:$0xf]
    %v120 = vld [vmem:[#allocation4 + $0x50] sm:$0xf]
    %v121 = vld [vmem:[#allocation4 + $0x54] sm:$0xf]
    %v122 = vld [vmem:[#allocation4 + $0x58] sm:$0xf]
    %v123 = vld [vmem:[#allocation4 + $0x5c] sm:$0xf]
    %v124 = vld [vmem:[#allocation4 + $0x60] sm:$0xf]
    %v125 = vld [vmem:[#allocation4 + $0x64] sm:$0xf]
    %v126 = vld [vmem:[#allocation4 + $0x68] sm:$0xf]
    %v127 = vld [vmem:[#allocation4 + $0x6c] sm:$0xf]
    %v128 = vld [vmem:[#allocation4 + $0x70] sm:$0xf]
    %v129 = vld [vmem:[#allocation4 + $0x74] sm:$0xf]
    %v130 = vld [vmem:[#allocation4 + $0x78] sm:$0xf]
    %v131 = vld [vmem:[#allocation4 + $0x7c] sm:$0xf]
    %s132 = scalar_lea.vmem [#allocation4], 128
    %v133 = vld [vmem:[%s132] sm:$0xf]
    %v134 = vld [vmem:[%s132 + $0x4] sm:$0xf]
    %v135 = vld [vmem:[%s132 + $0x8] sm:$0xf]
    %v136 = vld [vmem:[%s132 + $0xc] sm:$0xf]
    %v137 = vld [vmem:[%s132 + $0x10] sm:$0xf]
    %v138 = vld [vmem:[%s132 + $0x14] sm:$0xf]
    %v139 = vld [vmem:[%s132 + $0x18] sm:$0xf]
    %v140 = vld [vmem:[%s132 + $0x1c] sm:$0xf]
    %v141 = vld [vmem:[%s132 + $0x20] sm:$0xf]
    %v142 = vld [vmem:[%s132 + $0x24] sm:$0xf]
    %v143 = vld [vmem:[%s132 + $0x28] sm:$0xf]
    %v144 = vld [vmem:[%s132 + $0x2c] sm:$0xf]
    %v145 = vld [vmem:[%s132 + $0x30] sm:$0xf]
    %v146 = vld [vmem:[%s132 + $0x34] sm:$0xf]
    %v147 = vld [vmem:[%s132 + $0x38] sm:$0xf]
    %v148 = vld [vmem:[%s132 + $0x3c] sm:$0xf]
    %v149 = vld [vmem:[%s132 + $0x40] sm:$0xf]
    %v150 = vld [vmem:[%s132 + $0x44] sm:$0xf]
    %v151 = vld [vmem:[%s132 + $0x48] sm:$0xf]
    %v152 = vld [vmem:[%s132 + $0x4c] sm:$0xf]
    %v153 = vld [vmem:[%s132 + $0x50] sm:$0xf]
    %v154 = vld [vmem:[%s132 + $0x54] sm:$0xf]
    %v155 = vld [vmem:[%s132 + $0x58] sm:$0xf]
    %v156 = vld [vmem:[%s132 + $0x5c] sm:$0xf]
    %v157 = vld [vmem:[%s132 + $0x60] sm:$0xf]
    %v158 = vld [vmem:[%s132 + $0x64] sm:$0xf]
    %v159 = vld [vmem:[%s132 + $0x68] sm:$0xf]
    %v160 = vld [vmem:[%s132 + $0x6c] sm:$0xf]
    %v161 = vld [vmem:[%s132 + $0x70] sm:$0xf]
    %v162 = vld [vmem:[%s132 + $0x74] sm:$0xf]
    %v163 = vld [vmem:[%s132 + $0x78] sm:$0xf]
    %v164 = vld [vmem:[%s132 + $0x7c] sm:$0xf]
    %s165 = scalar_lea.vmem [#allocation4], 256
    %v166 = vld [vmem:[%s165] sm:$0xf]
    %v167 = vld [vmem:[%s165 + $0x4] sm:$0xf]
    %v168 = vld [vmem:[%s165 + $0x8] sm:$0xf]
    %v169 = vld [vmem:[%s165 + $0xc] sm:$0xf]
    %v170 = vld [vmem:[%s165 + $0x10] sm:$0xf]
    %v171 = vld [vmem:[%s165 + $0x14] sm:$0xf]
    %v172 = vld [vmem:[%s165 + $0x18] sm:$0xf]
    %v173 = vld [vmem:[%s165 + $0x1c] sm:$0xf]
    %v174 = vld [vmem:[%s165 + $0x20] sm:$0xf]
    %v175 = vld [vmem:[%s165 + $0x24] sm:$0xf]
    %v176 = vld [vmem:[%s165 + $0x28] sm:$0xf]
    %v177 = vld [vmem:[%s165 + $0x2c] sm:$0xf]
    %v178 = vld [vmem:[%s165 + $0x30] sm:$0xf]
    %v179 = vld [vmem:[%s165 + $0x34] sm:$0xf]
    %v180 = vld [vmem:[%s165 + $0x38] sm:$0xf]
    %v181 = vld [vmem:[%s165 + $0x3c] sm:$0xf]
    %v182 = vpack.c.bf16 %v47, %v46
    %v199 = vunpack.c.l.b16 %v50
    %v200 = vunpack.c.h.b16 %v50
    %v201 = vunpack.c.l.b16 %v51
    %v202 = vunpack.c.h.b16 %v51
    %v203 = vunpack.c.l.b16 %v52
    %v204 = vunpack.c.h.b16 %v52
    %v205 = vunpack.c.l.b16 %v53
    %v206 = vunpack.c.h.b16 %v53
    %v207 = vunpack.c.l.b16 %v54
    %v208 = vunpack.c.h.b16 %v54
    %v209 = vunpack.c.l.b16 %v55
    %v210 = vunpack.c.h.b16 %v55
    %v211 = vunpack.c.l.b16 %v56
    %v212 = vunpack.c.h.b16 %v56
    %v213 = vunpack.c.l.b16 %v57
    %v214 = vunpack.c.h.b16 %v57
    %v215 = vunpack.c.l.b16 %v58
    %v216 = vunpack.c.h.b16 %v58
    %v217 = vunpack.c.l.b16 %v59
    %v218 = vunpack.c.h.b16 %v59
    %v219 = vunpack.c.l.b16 %v60
    %v220 = vunpack.c.h.b16 %v60
    %v221 = vunpack.c.l.b16 %v61
    %v222 = vunpack.c.h.b16 %v61
    %v223 = vunpack.c.l.b16 %v62
    %v224 = vunpack.c.h.b16 %v62
    %v225 = vunpack.c.l.b16 %v63
    %v226 = vunpack.c.h.b16 %v63
    %v227 = vunpack.c.l.b16 %v64
    %v228 = vunpack.c.h.b16 %v64
    %v229 = vunpack.c.l.b16 %v65
    %v230 = vunpack.c.h.b16 %v65
    %v231 = vpack.c.b16 %v201, %v199
    %v232 = vpack.c.b16 %v202, %v200
    %v233 = vpack.c.b16 %v205, %v203
    %v234 = vpack.c.b16 %v206, %v204
    %v235 = vpack.c.b16 %v209, %v207
    %v236 = vpack.c.b16 %v210, %v208
    %v237 = vpack.c.b16 %v213, %v211
    %v238 = vpack.c.b16 %v214, %v212
    %v239 = vpack.c.b16 %v217, %v215
    %v240 = vpack.c.b16 %v218, %v216
    %v241 = vpack.c.b16 %v221, %v219
    %v242 = vpack.c.b16 %v222, %v220
    %v243 = vpack.c.b16 %v225, %v223
    %v244 = vpack.c.b16 %v226, %v224
    %v245 = vpack.c.b16 %v229, %v227
    %v246 = vpack.c.b16 %v230, %v228
    %263 = vmatprep.subr.bf16.mxu0 %v232
    %264 = vmatpush1.bf16.msra.mxu0 %v231
    %265 = vmatprep.subr.bf16.mxu0 %v234
    %266 = vmatpush1.bf16.msra.mxu0 %v233
    %267 = vmatprep.subr.bf16.mxu0 %v236
    %268 = vmatpush1.bf16.msra.mxu0 %v235
    %269 = vmatprep.subr.bf16.mxu0 %v238
    %270 = vmatpush1.bf16.msra.mxu0 %v237
    %271 = vmatprep.subr.bf16.mxu0 %v240
    %272 = vmatpush1.bf16.msra.mxu0 %v239
    %273 = vmatprep.subr.bf16.mxu0 %v242
    %274 = vmatpush1.bf16.msra.mxu0 %v241
    %275 = vmatprep.subr.bf16.mxu0 %v244
    %276 = vmatpush1.bf16.msra.mxu0 %v243
    %277 = vmatprep.subr.bf16.mxu0 %v246
    %278 = vmatpush1.bf16.msra.mxu0 %v245
    %279 = vmatprep.subr.bf16.mxu0 0
    %280 = vmatpush1.bf16.msra.mxu0 0
    %281 = vmatprep.subr.bf16.mxu0 0
    %282 = vmatpush1.bf16.msra.mxu0 0
    %283 = vmatprep.subr.bf16.mxu0 0
    %284 = vmatpush1.bf16.msra.mxu0 0
    %285 = vmatprep.subr.bf16.mxu0 0
    %286 = vmatpush1.bf16.msra.mxu0 0
    %287 = vmatprep.subr.bf16.mxu0 0
    %288 = vmatpush1.bf16.msra.mxu0 0
    %289 = vmatprep.subr.bf16.mxu0 0
    %290 = vmatpush1.bf16.msra.mxu0 0
    %291 = vmatprep.subr.bf16.mxu0 0
    %292 = vmatpush1.bf16.msra.mxu0 0
    %293 = vmatprep.subr.bf16.mxu0 0
    %294 = vmatpush1.bf16.msra.mxu0 0
    %295 = vmatprep.mubr.bf16.mxu0 0
    %296 = vmatmul.mubr.bf16.gmra.mrb[0].mxu0 %v182
    %v297 = vpop.f32.mrb[0].mxu0
    %v298 = vadd.f32 0.0, %v297
    %v299 = vpop.f32.mrb[0].mxu0
    %v300 = vadd.f32 0.0, %v299
    %v301 = vpop.f32.mrb[0].mxu0
    %v302 = vadd.f32 0.0, %v301
    %v303 = vpop.f32.mrb[0].mxu0
    %v304 = vadd.f32 0.0, %v303
    %305 = vdwg.mxu0
    %v306 = vld [vmem:[%s3] sm:$0x3]
    %v307 = vld [vmem:[%s3 + $0x2] sm:$0x3]
    %v308 = vadd.f32 %v298, %v302
    %v309 = vrot.slane %v308, 4
    %v310 = vadd.f32 %v308, %v309
    %v311 = vrot.slane %v310, 2
    %v312 = vadd.f32 %v310, %v311
    %v313 = vrot.slane %v312, 1
    %v314 = vadd.f32 %v312, %v313
    %v315 = vadd.f32 %v300, %v304
    %v316 = vrot.slane %v315, 4
    %v317 = vadd.f32 %v315, %v316
    %v318 = vrot.slane %v317, 2
    %v319 = vadd.f32 %v317, %v318
    %v320 = vrot.slane %v319, 1
    %v321 = vadd.f32 %v319, %v320
    %v322 = vrcp.pop 16.0
    %v323 = vmul.f32 %v314, %v322
    %v324 = vmul.f32 %v321, %v322
    %v325 = vmul.f32 %v298, %v298
    %v326 = vmul.f32 %v300, %v300
    %v327 = vmul.f32 %v302, %v302
    %v328 = vmul.f32 %v304, %v304
    %v329 = vadd.f32 %v325, %v327
    %v330 = vrot.slane %v329, 4
    %v331 = vadd.f32 %v329, %v330
    %v332 = vrot.slane %v331, 2
    %v333 = vadd.f32 %v331, %v332
    %v334 = vrot.slane %v333, 1
    %v335 = vadd.f32 %v333, %v334
    %v336 = vadd.f32 %v326, %v328
    %v337 = vrot.slane %v336, 4
    %v338 = vadd.f32 %v336, %v337
    %v339 = vrot.slane %v338, 2
    %v340 = vadd.f32 %v338, %v339
    %v341 = vrot.slane %v340, 1
    %v342 = vadd.f32 %v340, %v341
    %v343 = vmul.f32 %v335, %v322
    %v344 = vmul.f32 %v342, %v322
    %v345 = vmul.f32 %v323, %v323
    %v346 = vmul.f32 %v324, %v324
    %v347 = vsub.f32 %v343, %v345
    %v348 = vsub.f32 %v344, %v346
    %v349 = vadd.f32 %v347, 1e-05
    %v350 = vadd.f32 %v348, 1e-05
    %v351 = vrsqrt.pop %v349
    %v352 = vrsqrt.pop %v350
    %v354 = vlaneseq
    %v355 = vshrl.u32 %v354, 7
    %v356 = vsub.s32 0, %v355
    %v357 = vrot.slane %v306, %v356
    %v358 = vlaneseq
    %v359 = vshrl.u32 %v358, 7
    %v360 = vsub.s32 1, %v359
    %v361 = vrot.slane %v306, %v360
    %v364 = vmul.f32 %v351, %v357
    %v365 = vmul.f32 %v352, %v361
    %v366 = vsub.f32 %v298, %v323
    %v367 = vsub.f32 %v300, %v324
    %v368 = vsub.f32 %v302, %v323
    %v369 = vsub.f32 %v304, %v324
    %v370 = vlaneseq
    %v371 = vshrl.u32 %v370, 7
    %v372 = vsub.s32 0, %v371
    %v373 = vrot.slane %v364, %v372
    %v374 = vlaneseq
    %v375 = vshrl.u32 %v374, 7
    %v376 = vsub.s32 0, %v375
    %v377 = vrot.slane %v365, %v376
    %v378 = vmul.f32 %v366, %v373
    %v379 = vmul.f32 %v367, %v377
    %v380 = vmul.f32 %v368, %v373
    %v381 = vmul.f32 %v369, %v377
    %v383 = vlaneseq
    %v384 = vshrl.u32 %v383, 7
    %v385 = vsub.s32 0, %v384
    %v386 = vrot.slane %v307, %v385
    %v387 = vlaneseq
    %v388 = vshrl.u32 %v387, 7
    %v389 = vsub.s32 1, %v388
    %v390 = vrot.slane %v307, %v389
    %v393 = vadd.f32 %v378, %v386
    %v394 = vadd.f32 %v379, %v390
    %v395 = vadd.f32 %v380, %v386
    %v396 = vadd.f32 %v381, %v390
    %v397 = vmax.f32 %v393, 0.0
    %v398 = vmax.f32 %v394, 0.0
    %v399 = vmax.f32 %v395, 0.0
    %v400 = vmax.f32 %v396, 0.0
    %v401 = vpack.c.bf16 %v399, %v397
    %v402 = vpack.c.bf16 %v400, %v398
    %v435 = vunpack.c.l.b16 %v100
    %v436 = vunpack.c.l.b16 %v101
    %v437 = vunpack.c.l.b16 %v102
    %v438 = vunpack.c.l.b16 %v103
    %v439 = vunpack.c.l.b16 %v104
    %v440 = vunpack.c.l.b16 %v105
    %v441 = vunpack.c.l.b16 %v106
    %v442 = vunpack.c.l.b16 %v107
    %v443 = vunpack.c.l.b16 %v108
    %v444 = vunpack.c.l.b16 %v109
    %v445 = vunpack.c.l.b16 %v110
    %v446 = vunpack.c.l.b16 %v111
    %v447 = vunpack.c.l.b16 %v112
    %v448 = vunpack.c.l.b16 %v113
    %v449 = vunpack.c.l.b16 %v114
    %v450 = vunpack.c.l.b16 %v115
    %v451 = vunpack.c.l.b16 %v116
    %v452 = vunpack.c.l.b16 %v117
    %v453 = vunpack.c.l.b16 %v118
    %v454 = vunpack.c.l.b16 %v119
    %v455 = vunpack.c.l.b16 %v120
    %v456 = vunpack.c.l.b16 %v121
    %v457 = vunpack.c.l.b16 %v122
    %v458 = vunpack.c.l.b16 %v123
    %v459 = vunpack.c.l.b16 %v124
    %v460 = vunpack.c.l.b16 %v125
    %v461 = vunpack.c.l.b16 %v126
    %v462 = vunpack.c.l.b16 %v127
    %v463 = vunpack.c.l.b16 %v128
    %v464 = vunpack.c.l.b16 %v129
    %v465 = vunpack.c.l.b16 %v130
    %v466 = vunpack.c.l.b16 %v131
    %v467 = vpack.c.b16 %v436, %v435
    %v468 = vpack.c.b16 %v438, %v437
    %v469 = vpack.c.b16 %v440, %v439
    %v470 = vpack.c.b16 %v442, %v441
    %v471 = vpack.c.b16 %v444, %v443
    %v472 = vpack.c.b16 %v446, %v445
    %v473 = vpack.c.b16 %v448, %v447
    %v474 = vpack.c.b16 %v450, %v449
    %v475 = vpack.c.b16 %v452, %v451
    %v476 = vpack.c.b16 %v454, %v453
    %v477 = vpack.c.b16 %v456, %v455
    %v478 = vpack.c.b16 %v458, %v457
    %v479 = vpack.c.b16 %v460, %v459
    %v480 = vpack.c.b16 %v462, %v461
    %v481 = vpack.c.b16 %v464, %v463
    %v482 = vpack.c.b16 %v466, %v465
    %499 = vmatprep.subr.bf16.mxu0 0
    %500 = vmatpush1.bf16.msra.mxu0 %v467
    %501 = vmatprep.subr.bf16.mxu0 0
    %502 = vmatpush1.bf16.msra.mxu0 %v468
    %503 = vmatprep.subr.bf16.mxu0 0
    %504 = vmatpush1.bf16.msra.mxu0 %v469
    %505 = vmatprep.subr.bf16.mxu0 0
    %506 = vmatpush1.bf16.msra.mxu0 %v470
    %507 = vmatprep.subr.bf16.mxu0 0
    %508 = vmatpush1.bf16.msra.mxu0 %v471
    %509 = vmatprep.subr.bf16.mxu0 0
    %510 = vmatpush1.bf16.msra.mxu0 %v472
    %511 = vmatprep.subr.bf16.mxu0 0
    %512 = vmatpush1.bf16.msra.mxu0 %v473
    %513 = vmatprep.subr.bf16.mxu0 0
    %514 = vmatpush1.bf16.msra.mxu0 %v474
    %515 = vmatprep.subr.bf16.mxu0 0
    %516 = vmatpush1.bf16.msra.mxu0 %v475
    %517 = vmatprep.subr.bf16.mxu0 0
    %518 = vmatpush1.bf16.msra.mxu0 %v476
    %519 = vmatprep.subr.bf16.mxu0 0
    %520 = vmatpush1.bf16.msra.mxu0 %v477
    %521 = vmatprep.subr.bf16.mxu0 0
    %522 = vmatpush1.bf16.msra.mxu0 %v478
    %523 = vmatprep.subr.bf16.mxu0 0
    %524 = vmatpush1.bf16.msra.mxu0 %v479
    %525 = vmatprep.subr.bf16.mxu0 0
    %526 = vmatpush1.bf16.msra.mxu0 %v480
    %527 = vmatprep.subr.bf16.mxu0 0
    %528 = vmatpush1.bf16.msra.mxu0 %v481
    %529 = vmatprep.subr.bf16.mxu0 0
    %530 = vmatpush1.bf16.msra.mxu0 %v482
    %531 = vmatprep.mubr.bf16.mxu0 %v402
    %532 = vmatmul.mubr.bf16.gmra.mrb[0].mxu0 %v401
    %v533 = vpop.f32.mrb[0].mxu0
    %v534 = vadd.f32 0.0, %v533
    %v535 = vpop.f32.mrb[0].mxu0
    %v536 = vpop.f32.mrb[0].mxu0
    %v537 = vadd.f32 0.0, %v536
    %v538 = vpop.f32.mrb[0].mxu0
    %539 = vdwg.mxu0
    %v540 = vld [vmem:[%s3 + $0x4] sm:$0x1]
    %v541 = vld [vmem:[%s3 + $0x5] sm:$0x1]
    %v542 = vadd.f32 %v534, %v537
    %v543 = vrot.slane %v542, 4
    %v544 = vadd.f32 %v542, %v543
    %v545 = vrot.slane %v544, 2
    %v546 = vadd.f32 %v544, %v545
    %v547 = vrot.slane %v546, 1
    %v548 = vadd.f32 %v546, %v547
    %v549 = vmul.f32 %v548, %v322
    %v550 = vmul.f32 %v534, %v534
    %v551 = vmul.f32 %v537, %v537
    %v552 = vadd.f32 %v550, %v551
    %v553 = vrot.slane %v552, 4
    %v554 = vadd.f32 %v552, %v553
    %v555 = vrot.slane %v554, 2
    %v556 = vadd.f32 %v554, %v555
    %v557 = vrot.slane %v556, 1
    %v558 = vadd.f32 %v556, %v557
    %v559 = vmul.f32 %v558, %v322
    %v560 = vmul.f32 %v549, %v549
    %v561 = vsub.f32 %v559, %v560
    %v562 = vadd.f32 %v561, 1e-05
    %v563 = vrsqrt.pop %v562
    %v564 = vmul.f32 %v563, %v540
    %v565 = vsub.f32 %v534, %v549
    %v566 = vsub.f32 %v537, %v549
    %v567 = vlaneseq
    %v568 = vshrl.u32 %v567, 7
    %v569 = vsub.s32 0, %v568
    %v570 = vrot.slane %v564, %v569
    %v571 = vmul.f32 %v565, %v570
    %v572 = vmul.f32 %v566, %v570
    %v574 = vlaneseq
    %v575 = vshrl.u32 %v574, 7
    %v576 = vsub.s32 0, %v575
    %v577 = vrot.slane %v541, %v576
    %v579 = vadd.f32 %v571, %v577
    %v580 = vadd.f32 %v572, %v577
    %v581 = vmax.f32 %v579, 0.0
    %v582 = vmax.f32 %v580, 0.0
    %v583 = vpack.c.bf16 %v582, %v581
    %v584 = vld [vmem:[%s3 + $0x6] sm:$0x3]
    %v586 = vlaneseq
    %v587 = vshrl.u32 %v586, 7
    %v588 = vsub.s32 0, %v587
    %v589 = vrot.slane %v584, %v588
    %v590 = vlaneseq
    %v591 = vshrl.u32 %v590, 7
    %v592 = vsub.s32 1, %v591
    %v593 = vrot.slane %v584, %v592
    %v612 = vunpack.c.l.b16 %v67
    %v613 = vunpack.c.h.b16 %v67
    %v614 = vunpack.c.l.b16 %v68
    %v615 = vunpack.c.h.b16 %v68
    %v616 = vunpack.c.l.b16 %v69
    %v617 = vunpack.c.h.b16 %v69
    %v618 = vunpack.c.l.b16 %v70
    %v619 = vunpack.c.h.b16 %v70
    %v620 = vunpack.c.l.b16 %v71
    %v621 = vunpack.c.h.b16 %v71
    %v622 = vunpack.c.l.b16 %v72
    %v623 = vunpack.c.h.b16 %v72
    %v624 = vunpack.c.l.b16 %v73
    %v625 = vunpack.c.h.b16 %v73
    %v626 = vunpack.c.l.b16 %v74
    %v627 = vunpack.c.h.b16 %v74
    %v628 = vunpack.c.l.b16 %v75
    %v629 = vunpack.c.h.b16 %v75
    %v630 = vunpack.c.l.b16 %v76
    %v631 = vunpack.c.h.b16 %v76
    %v632 = vunpack.c.l.b16 %v77
    %v633 = vunpack.c.h.b16 %v77
    %v634 = vunpack.c.l.b16 %v78
    %v635 = vunpack.c.h.b16 %v78
    %v636 = vunpack.c.l.b16 %v79
    %v637 = vunpack.c.h.b16 %v79
    %v638 = vunpack.c.l.b16 %v80
    %v639 = vunpack.c.h.b16 %v80
    %v640 = vunpack.c.l.b16 %v81
    %v641 = vunpack.c.h.b16 %v81
    %v642 = vunpack.c.l.b16 %v82
    %v643 = vunpack.c.h.b16 %v82
    %v644 = vpack.c.b16 %v614, %v612
    %v645 = vpack.c.b16 %v615, %v613
    %v646 = vpack.c.b16 %v618, %v616
    %v647 = vpack.c.b16 %v619, %v617
    %v648 = vpack.c.b16 %v622, %v620
    %v649 = vpack.c.b16 %v623, %v621
    %v650 = vpack.c.b16 %v626, %v624
    %v651 = vpack.c.b16 %v627, %v625
    %v652 = vpack.c.b16 %v630, %v628
    %v653 = vpack.c.b16 %v631, %v629
    %v654 = vpack.c.b16 %v634, %v632
    %v655 = vpack.c.b16 %v635, %v633
    %v656 = vpack.c.b16 %v638, %v636
    %v657 = vpack.c.b16 %v639, %v637
    %v658 = vpack.c.b16 %v642, %v640
    %v659 = vpack.c.b16 %v643, %v641
    %676 = vmatprep.subr.bf16.mxu0 %v645
    %677 = vmatpush1.bf16.msra.mxu0 %v644
    %678 = vmatprep.subr.bf16.mxu0 %v647
    %679 = vmatpush1.bf16.msra.mxu0 %v646
    %680 = vmatprep.subr.bf16.mxu0 %v649
    %681 = vmatpush1.bf16.msra.mxu0 %v648
    %682 = vmatprep.subr.bf16.mxu0 %v651
    %683 = vmatpush1.bf16.msra.mxu0 %v650
    %684 = vmatprep.subr.bf16.mxu0 %v653
    %685 = vmatpush1.bf16.msra.mxu0 %v652
    %686 = vmatprep.subr.bf16.mxu0 %v655
    %687 = vmatpush1.bf16.msra.mxu0 %v654
    %688 = vmatprep.subr.bf16.mxu0 %v657
    %689 = vmatpush1.bf16.msra.mxu0 %v656
    %690 = vmatprep.subr.bf16.mxu0 %v659
    %691 = vmatpush1.bf16.msra.mxu0 %v658
    %692 = vmatprep.subr.bf16.mxu0 0
    %693 = vmatpush1.bf16.msra.mxu0 0
    %694 = vmatprep.subr.bf16.mxu0 0
    %695 = vmatpush1.bf16.msra.mxu0 0
    %696 = vmatprep.subr.bf16.mxu0 0
    %697 = vmatpush1.bf16.msra.mxu0 0
    %698 = vmatprep.subr.bf16.mxu0 0
    %699 = vmatpush1.bf16.msra.mxu0 0
    %700 = vmatprep.subr.bf16.mxu0 0
    %701 = vmatpush1.bf16.msra.mxu0 0
    %702 = vmatprep.subr.bf16.mxu0 0
    %703 = vmatpush1.bf16.msra.mxu0 0
    %704 = vmatprep.subr.bf16.mxu0 0
    %705 = vmatpush1.bf16.msra.mxu0 0
    %706 = vmatprep.subr.bf16.mxu0 0
    %707 = vmatpush1.bf16.msra.mxu0 0
    %708 = vmatprep.mubr.bf16.mxu0 0
    %709 = vmatmul.mubr.bf16.gmra.mrb[0].mxu0 %v583
    %v710 = vpop.f32.mrb[0].mxu0
    %v711 = vadd.f32 %v589, %v710
    %v712 = vpop.f32.mrb[0].mxu0
    %v713 = vadd.f32 %v593, %v712
    %v714 = vpop.f32.mrb[0].mxu0
    %v715 = vadd.f32 %v589, %v714
    %v716 = vpop.f32.mrb[0].mxu0
    %v717 = vadd.f32 %v593, %v716
    %718 = vdwg.mxu0
    %719 = vst [vmem:[%s4 + $0x8] sm:$0xff] %v711
    %720 = vst [vmem:[%s4 + $0x10] sm:$0xff] %v713
    %721 = vst [vmem:[%s4 + $0x20] sm:$0xff] %v715
    %722 = vst [vmem:[%s4 + $0x28] sm:$0xff] %v717
    %v723 = vmul.f32 %v713, 0.5
    %v724 = vmul.f32 %v717, 0.5
    %v725 = vmul.f32 %v723, 1.442695
    %v726 = vpow.pop %v725
    %v727 = vmul.f32 %v724, 1.442695
    %v728 = vpow.pop %v727
    %v729 = vmul.f32 %v48, %v726
    %v730 = vmul.f32 %v49, %v728
    %v731 = vadd.f32 %v729, %v711
    %v732 = vadd.f32 %v730, %v715
    %v733 = vpack.c.bf16 %v732, %v731
    %v734 = vld [vmem:[%s3 + $0x8] sm:$0x3]
    %v736 = vlaneseq
    %v737 = vshrl.u32 %v736, 7
    %v738 = vsub.s32 0, %v737
    %v739 = vrot.slane %v734, %v738
    %v740 = vlaneseq
    %v741 = vshrl.u32 %v740, 7
    %v742 = vsub.s32 1, %v741
    %v743 = vrot.slane %v734, %v742
    %v762 = vunpack.c.l.b16 %v84
    %v763 = vunpack.c.h.b16 %v84
    %v764 = vunpack.c.l.b16 %v85
    %v765 = vunpack.c.h.b16 %v85
    %v766 = vunpack.c.l.b16 %v86
    %v767 = vunpack.c.h.b16 %v86
    %v768 = vunpack.c.l.b16 %v87
    %v769 = vunpack.c.h.b16 %v87
    %v770 = vunpack.c.l.b16 %v88
    %v771 = vunpack.c.h.b16 %v88
    %v772 = vunpack.c.l.b16 %v89
    %v773 = vunpack.c.h.b16 %v89
    %v774 = vunpack.c.l.b16 %v90
    %v775 = vunpack.c.h.b16 %v90
    %v776 = vunpack.c.l.b16 %v91
    %v777 = vunpack.c.h.b16 %v91
    %v778 = vunpack.c.l.b16 %v92
    %v779 = vunpack.c.h.b16 %v92
    %v780 = vunpack.c.l.b16 %v93
    %v781 = vunpack.c.h.b16 %v93
    %v782 = vunpack.c.l.b16 %v94
    %v783 = vunpack.c.h.b16 %v94
    %v784 = vunpack.c.l.b16 %v95
    %v785 = vunpack.c.h.b16 %v95
    %v786 = vunpack.c.l.b16 %v96
    %v787 = vunpack.c.h.b16 %v96
    %v788 = vunpack.c.l.b16 %v97
    %v789 = vunpack.c.h.b16 %v97
    %v790 = vunpack.c.l.b16 %v98
    %v791 = vunpack.c.h.b16 %v98
    %v792 = vunpack.c.l.b16 %v99
    %v793 = vunpack.c.h.b16 %v99
    %v794 = vpack.c.b16 %v764, %v762
    %v795 = vpack.c.b16 %v765, %v763
    %v796 = vpack.c.b16 %v768, %v766
    %v797 = vpack.c.b16 %v769, %v767
    %v798 = vpack.c.b16 %v772, %v770
    %v799 = vpack.c.b16 %v773, %v771
    %v800 = vpack.c.b16 %v776, %v774
    %v801 = vpack.c.b16 %v777, %v775
    %v802 = vpack.c.b16 %v780, %v778
    %v803 = vpack.c.b16 %v781, %v779
    %v804 = vpack.c.b16 %v784, %v782
    %v805 = vpack.c.b16 %v785, %v783
    %v806 = vpack.c.b16 %v788, %v786
    %v807 = vpack.c.b16 %v789, %v787
    %v808 = vpack.c.b16 %v792, %v790
    %v809 = vpack.c.b16 %v793, %v791
    %826 = vmatprep.subr.bf16.mxu0 %v795
    %827 = vmatpush1.bf16.msra.mxu0 %v794
    %828 = vmatprep.subr.bf16.mxu0 %v797
    %829 = vmatpush1.bf16.msra.mxu0 %v796
    %830 = vmatprep.subr.bf16.mxu0 %v799
    %831 = vmatpush1.bf16.msra.mxu0 %v798
    %832 = vmatprep.subr.bf16.mxu0 %v801
    %833 = vmatpush1.bf16.msra.mxu0 %v800
    %834 = vmatprep.subr.bf16.mxu0 %v803
    %835 = vmatpush1.bf16.msra.mxu0 %v802
    %836 = vmatprep.subr.bf16.mxu0 %v805
    %837 = vmatpush1.bf16.msra.mxu0 %v804
    %838 = vmatprep.subr.bf16.mxu0 %v807
    %839 = vmatpush1.bf16.msra.mxu0 %v806
    %840 = vmatprep.subr.bf16.mxu0 %v809
    %841 = vmatpush1.bf16.msra.mxu0 %v808
    %842 = vmatprep.subr.bf16.mxu0 0
    %843 = vmatpush1.bf16.msra.mxu0 0
    %844 = vmatprep.subr.bf16.mxu0 0
    %845 = vmatpush1.bf16.msra.mxu0 0
    %846 = vmatprep.subr.bf16.mxu0 0
    %847 = vmatpush1.bf16.msra.mxu0 0
    %848 = vmatprep.subr.bf16.mxu0 0
    %849 = vmatpush1.bf16.msra.mxu0 0
    %850 = vmatprep.subr.bf16.mxu0 0
    %851 = vmatpush1.bf16.msra.mxu0 0
    %852 = vmatprep.subr.bf16.mxu0 0
    %853 = vmatpush1.bf16.msra.mxu0 0
    %854 = vmatprep.subr.bf16.mxu0 0
    %855 = vmatpush1.bf16.msra.mxu0 0
    %856 = vmatprep.subr.bf16.mxu0 0
    %857 = vmatpush1.bf16.msra.mxu0 0
    %858 = vmatprep.mubr.bf16.mxu0 0
    %859 = vmatmul.mubr.bf16.gmra.mrb[0].mxu0 %v733
    %v860 = vpop.f32.mrb[0].mxu0
    %v861 = vadd.f32 %v739, %v860
    %v862 = vpop.f32.mrb[0].mxu0
    %v863 = vadd.f32 %v743, %v862
    %v864 = vpop.f32.mrb[0].mxu0
    %v865 = vadd.f32 %v739, %v864
    %v866 = vpop.f32.mrb[0].mxu0
    %v867 = vadd.f32 %v743, %v866
    %868 = vdwg.mxu0
    %v869 = vmax.f32 %v861, 0.0
    %v870 = vmax.f32 %v863, 0.0
    %v871 = vmax.f32 %v865, 0.0
    %v872 = vmax.f32 %v867, 0.0
    %v873 = vpack.c.bf16 %v871, %v869
    %v874 = vpack.c.bf16 %v872, %v870
    %v907 = vunpack.c.l.b16 %v133
    %v908 = vunpack.c.l.b16 %v134
    %v909 = vunpack.c.l.b16 %v135
    %v910 = vunpack.c.l.b16 %v136
    %v911 = vunpack.c.l.b16 %v137
    %v912 = vunpack.c.l.b16 %v138
    %v913 = vunpack.c.l.b16 %v139
    %v914 = vunpack.c.l.b16 %v140
    %v915 = vunpack.c.l.b16 %v141
    %v916 = vunpack.c.l.b16 %v142
    %v917 = vunpack.c.l.b16 %v143
    %v918 = vunpack.c.l.b16 %v144
    %v919 = vunpack.c.l.b16 %v145
    %v920 = vunpack.c.l.b16 %v146
    %v921 = vunpack.c.l.b16 %v147
    %v922 = vunpack.c.l.b16 %v148
    %v923 = vunpack.c.l.b16 %v149
    %v924 = vunpack.c.l.b16 %v150
    %v925 = vunpack.c.l.b16 %v151
    %v926 = vunpack.c.l.b16 %v152
    %v927 = vunpack.c.l.b16 %v153
    %v928 = vunpack.c.l.b16 %v154
    %v929 = vunpack.c.l.b16 %v155
    %v930 = vunpack.c.l.b16 %v156
    %v931 = vunpack.c.l.b16 %v157
    %v932 = vunpack.c.l.b16 %v158
    %v933 = vunpack.c.l.b16 %v159
    %v934 = vunpack.c.l.b16 %v160
    %v935 = vunpack.c.l.b16 %v161
    %v936 = vunpack.c.l.b16 %v162
    %v937 = vunpack.c.l.b16 %v163
    %v938 = vunpack.c.l.b16 %v164
    %v939 = vpack.c.b16 %v908, %v907
    %v940 = vpack.c.b16 %v910, %v909
    %v941 = vpack.c.b16 %v912, %v911
    %v942 = vpack.c.b16 %v914, %v913
    %v943 = vpack.c.b16 %v916, %v915
    %v944 = vpack.c.b16 %v918, %v917
    %v945 = vpack.c.b16 %v920, %v919
    %v946 = vpack.c.b16 %v922, %v921
    %v947 = vpack.c.b16 %v924, %v923
    %v948 = vpack.c.b16 %v926, %v925
    %v949 = vpack.c.b16 %v928, %v927
    %v950 = vpack.c.b16 %v930, %v929
    %v951 = vpack.c.b16 %v932, %v931
    %v952 = vpack.c.b16 %v934, %v933
    %v953 = vpack.c.b16 %v936, %v935
    %v954 = vpack.c.b16 %v938, %v937
    %971 = vmatprep.subr.bf16.mxu0 0
    %972 = vmatpush1.bf16.msra.mxu0 %v939
    %973 = vmatprep.subr.bf16.mxu0 0
    %974 = vmatpush1.bf16.msra.mxu0 %v940
    %975 = vmatprep.subr.bf16.mxu0 0
    %976 = vmatpush1.bf16.msra.mxu0 %v941
    %977 = vmatprep.subr.bf16.mxu0 0
    %978 = vmatpush1.bf16.msra.mxu0 %v942
    %979 = vmatprep.subr.bf16.mxu0 0
    %980 = vmatpush1.bf16.msra.mxu0 %v943
    %981 = vmatprep.subr.bf16.mxu0 0
    %982 = vmatpush1.bf16.msra.mxu0 %v944
    %983 = vmatprep.subr.bf16.mxu0 0
    %984 = vmatpush1.bf16.msra.mxu0 %v945
    %985 = vmatprep.subr.bf16.mxu0 0
    %986 = vmatpush1.bf16.msra.mxu0 %v946
    %987 = vmatprep.subr.bf16.mxu0 0
    %988 = vmatpush1.bf16.msra.mxu0 %v947
    %989 = vmatprep.subr.bf16.mxu0 0
    %990 = vmatpush1.bf16.msra.mxu0 %v948
    %991 = vmatprep.subr.bf16.mxu0 0
    %992 = vmatpush1.bf16.msra.mxu0 %v949
    %993 = vmatprep.subr.bf16.mxu0 0
    %994 = vmatpush1.bf16.msra.mxu0 %v950
    %995 = vmatprep.subr.bf16.mxu0 0
    %996 = vmatpush1.bf16.msra.mxu0 %v951
    %997 = vmatprep.subr.bf16.mxu0 0
    %998 = vmatpush1.bf16.msra.mxu0 %v952
    %999 = vmatprep.subr.bf16.mxu0 0
    %1000 = vmatpush1.bf16.msra.mxu0 %v953
    %1001 = vmatprep.subr.bf16.mxu0 0
    %1002 = vmatpush1.bf16.msra.mxu0 %v954
    %1003 = vmatprep.mubr.bf16.mxu0 %v874
    %1004 = vmatmul.mubr.bf16.gmra.mrb[0].mxu0 %v873
    %v1005 = vpop.f32.mrb[0].mxu0
    %v1006 = vadd.f32 0.0, %v1005
    %v1007 = vpop.f32.mrb[0].mxu0
    %v1008 = vpop.f32.mrb[0].mxu0
    %v1009 = vadd.f32 0.0, %v1008
    %v1010 = vpop.f32.mrb[0].mxu0
    %1011 = vdwg.mxu0
    %v1012 = vld [vmem:[%s3 + $0xa] sm:$0x1]
    %v1013 = vld [vmem:[%s3 + $0xb] sm:$0x1]
    %v1014 = vadd.f32 %v1006, %v1009
    %v1015 = vrot.slane %v1014, 4
    %v1016 = vadd.f32 %v1014, %v1015
    %v1017 = vrot.slane %v1016, 2
    %v1018 = vadd.f32 %v1016, %v1017
    %v1019 = vrot.slane %v1018, 1
    %v1020 = vadd.f32 %v1018, %v1019
    %v1021 = vmul.f32 %v1020, %v322
    %v1022 = vmul.f32 %v1006, %v1006
    %v1023 = vmul.f32 %v1009, %v1009
    %v1024 = vadd.f32 %v1022, %v1023
    %v1025 = vrot.slane %v1024, 4
    %v1026 = vadd.f32 %v1024, %v1025
    %v1027 = vrot.slane %v1026, 2
    %v1028 = vadd.f32 %v1026, %v1027
    %v1029 = vrot.slane %v1028, 1
    %v1030 = vadd.f32 %v1028, %v1029
    %v1031 = vmul.f32 %v1030, %v322
    %v1032 = vmul.f32 %v1021, %v1021
    %v1033 = vsub.f32 %v1031, %v1032
    %v1034 = vadd.f32 %v1033, 1e-05
    %v1035 = vrsqrt.pop %v1034
    %v1036 = vmul.f32 %v1035, %v1012
    %v1037 = vsub.f32 %v1006, %v1021
    %v1038 = vsub.f32 %v1009, %v1021
    %v1039 = vlaneseq
    %v1040 = vshrl.u32 %v1039, 7
    %v1041 = vsub.s32 0, %v1040
    %v1042 = vrot.slane %v1036, %v1041
    %v1043 = vmul.f32 %v1037, %v1042
    %v1044 = vmul.f32 %v1038, %v1042
    %v1046 = vlaneseq
    %v1047 = vshrl.u32 %v1046, 7
    %v1048 = vsub.s32 0, %v1047
    %v1049 = vrot.slane %v1013, %v1048
    %v1051 = vadd.f32 %v1043, %v1049
    %v1052 = vadd.f32 %v1044, %v1049
    %v1053 = vmax.f32 %v1051, 0.0
    %v1054 = vmax.f32 %v1052, 0.0
    %v1055 = vpack.c.bf16 %v1054, %v1053
    %v1056 = vld [vmem:[%s3 + $0xc] sm:$0x1]
    %v1058 = vlaneseq
    %v1059 = vshrl.u32 %v1058, 7
    %v1060 = vsub.s32 0, %v1059
    %v1061 = vrot.slane %v1056, %v1060
    %v1079 = vunpack.c.l.b16 %v166
    %v1080 = vunpack.c.l.b16 %v167
    %v1081 = vunpack.c.l.b16 %v168
    %v1082 = vunpack.c.l.b16 %v169
    %v1083 = vunpack.c.l.b16 %v170
    %v1084 = vunpack.c.l.b16 %v171
    %v1085 = vunpack.c.l.b16 %v172
    %v1086 = vunpack.c.l.b16 %v173
    %v1087 = vunpack.c.l.b16 %v174
    %v1088 = vunpack.c.l.b16 %v175
    %v1089 = vunpack.c.l.b16 %v176
    %v1090 = vunpack.c.l.b16 %v177
    %v1091 = vunpack.c.l.b16 %v178
    %v1092 = vunpack.c.l.b16 %v179
    %v1093 = vunpack.c.l.b16 %v180
    %v1094 = vunpack.c.l.b16 %v181
    %v1095 = vpack.c.b16 %v1080, %v1079
    %v1096 = vpack.c.b16 %v1082, %v1081
    %v1097 = vpack.c.b16 %v1084, %v1083
    %v1098 = vpack.c.b16 %v1086, %v1085
    %v1099 = vpack.c.b16 %v1088, %v1087
    %v1100 = vpack.c.b16 %v1090, %v1089
    %v1101 = vpack.c.b16 %v1092, %v1091
    %v1102 = vpack.c.b16 %v1094, %v1093
    %1111 = vmatprep.subr.bf16.mxu0 0
    %1112 = vmatpush1.bf16.msra.mxu0 %v1095
    %1113 = vmatprep.subr.bf16.mxu0 0
    %1114 = vmatpush1.bf16.msra.mxu0 %v1096
    %1115 = vmatprep.subr.bf16.mxu0 0
    %1116 = vmatpush1.bf16.msra.mxu0 %v1097
    %1117 = vmatprep.subr.bf16.mxu0 0
    %1118 = vmatpush1.bf16.msra.mxu0 %v1098
    %1119 = vmatprep.subr.bf16.mxu0 0
    %1120 = vmatpush1.bf16.msra.mxu0 %v1099
    %1121 = vmatprep.subr.bf16.mxu0 0
    %1122 = vmatpush1.bf16.msra.mxu0 %v1100
    %1123 = vmatprep.subr.bf16.mxu0 0
    %1124 = vmatpush1.bf16.msra.mxu0 %v1101
    %1125 = vmatprep.subr.bf16.mxu0 0
    %1126 = vmatpush1.bf16.msra.mxu0 %v1102
    %1127 = vmatprep.subr.bf16.mxu0 0
    %1128 = vmatpush1.bf16.msra.mxu0 0
    %1129 = vmatprep.subr.bf16.mxu0 0
    %1130 = vmatpush1.bf16.msra.mxu0 0
    %1131 = vmatprep.subr.bf16.mxu0 0
    %1132 = vmatpush1.bf16.msra.mxu0 0
    %1133 = vmatprep.subr.bf16.mxu0 0
    %1134 = vmatpush1.bf16.msra.mxu0 0
    %1135 = vmatprep.subr.bf16.mxu0 0
    %1136 = vmatpush1.bf16.msra.mxu0 0
    %1137 = vmatprep.subr.bf16.mxu0 0
    %1138 = vmatpush1.bf16.msra.mxu0 0
    %1139 = vmatprep.subr.bf16.mxu0 0
    %1140 = vmatpush1.bf16.msra.mxu0 0
    %1141 = vmatprep.subr.bf16.mxu0 0
    %1142 = vmatpush1.bf16.msra.mxu0 0
    %1143 = vmatprep.mubr.bf16.mxu0 0
    %1144 = vmatmul.mubr.bf16.gmra.mrb[0].mxu0 %v1055
    %v1145 = vpop.f32.mrb[0].mxu0
    %v1146 = vadd.f32 %v1061, %v1145
    %v1147 = vpop.f32.mrb[0].mxu0
    %v1148 = vpop.f32.mrb[0].mxu0
    %v1149 = vadd.f32 %v1061, %v1148
    %v1150 = vpop.f32.mrb[0].mxu0
    %1151 = vdwg.mxu0
    %v1152 = vxor.u32 %v1146, 2147483648
    %v1153 = vxor.u32 %v1149, 2147483648
    %v1154 = vmul.f32 %v1152, 1.442695
    %v1155 = vpow.pop %v1154
    %v1156 = vmul.f32 %v1153, 1.442695
    %v1157 = vpow.pop %v1156
    %v1158 = vadd.f32 %v1155, 1.0
    %v1159 = vadd.f32 %v1157, 1.0
    %v1160 = vrcp.pop %v1158
    %v1161 = vmul.f32 1.0, %v1160
    %v1162 = vrcp.pop %v1159
    %v1163 = vmul.f32 1.0, %v1162
    %1164 = vst [vmem:[%s4] sm:$0xff] %v1161
    %1165 = vst [vmem:[%s4 + $0x18] sm:$0xff] %v1163
    // Predicated region
    $region26: #{vae_forward.1} parent=1 // pred_check
      _
    $region27: #{vae_forward.1} parent=1 // pred_check_branch
      %1167 = sbr.rel (0) target = $region29
    $region28: #{vae_forward.1} parent=1 // pred_region
      _
    $region29: #{vae_forward.1} parent=1 // pred_fallthru
      _
    // Predicated region
    $region30: #{vae_forward.1} parent=1 // pred_check
      _
    $region31: #{vae_forward.1} parent=1 // pred_check_branch
      %1169 = sbr.rel (0) target = $region33
    $region32: #{vae_forward.1} parent=1 // pred_region
      _
    $region33: #{vae_forward.1} parent=1 // pred_fallthru
      _
    %1170 = vsyncpa [#allocation3], 1
    %1171 = vsyncpa [#allocation5], 1

</llo_original>
